<compile_context>
chip_gen: v6e
topology: v6e:2x2x1
jax: 0.10.0
libtpu: 0.0.40
codegen_flags: <defaults>
</compile_context>

<pallas_src>
import numpy as np
import jax
import jax.numpy as jnp
from jax.experimental import pallas as pl
from jax.experimental.pallas import tpu as pltpu

LANES = 128    # batch lane width
R_TILE = 8     # sublane rows of batch processed per grid step (1024 elems/step)


def cosine_beta_schedule_discrete(timesteps, s=0.008):
    """Cosine schedule (numpy, deterministic) — identical to the PyTorch ref."""
    steps = timesteps + 2
    x = np.linspace(0, steps, steps)
    alphas_cumprod = np.cos(0.5 * np.pi * (x / steps + s) / (1 + s)) ** 2
    alphas_cumprod = alphas_cumprod / alphas_cumprod[0]
    alphas = alphas_cumprod[1:] / alphas_cumprod[:-1]
    betas = 1 - alphas
    return betas.squeeze()


def _gather_kernel(scalars_ref, t_ref, betas_ref, abar_ref, bout_ref, aout_ref):
    # scalars_ref: (2,)             int32  SMEM  [scale, max_idx]
    # t_ref:       (R_TILE, LANES)  f32    batch tile (lanes fast, sublanes rows)
    # betas_ref:   (T1_pad, LANES)  f32    lane-broadcast table (VMEM resident)
    # abar_ref:    (T1_pad, LANES)  f32
    # bout_ref:    (R_TILE, LANES)  f32    betas[idx]
    # aout_ref:    (R_TILE, LANES)  f32    alphas_bar[idx]
    scale = scalars_ref[0].astype(jnp.float32)
    max_idx = scalars_ref[1]

    t = t_ref[...]                                                # (R_TILE, LANES)
    idx = jnp.clip(jnp.round(t * scale).astype(jnp.int32), 0, max_idx)

    betas_tab = betas_ref[...]                                    # (T1_pad, LANES)
    abar_tab = abar_ref[...]
    sub_ids = jax.lax.broadcasted_iota(jnp.int32, betas_tab.shape, 0)

    b_rows = []
    a_rows = []
    for r in range(R_TILE):                                       # static unroll
        onehot = sub_ids == idx[r:r + 1, :]                       # (T1_pad, LANES)
        b_rows.append(jnp.sum(jnp.where(onehot, betas_tab, 0.0),
                              axis=0, keepdims=True))
        a_rows.append(jnp.sum(jnp.where(onehot, abar_tab, 0.0),
                              axis=0, keepdims=True))
    # Single lane-dense full-block store per output (no masked sub-row stores).
    bout_ref[...] = jnp.concatenate(b_rows, axis=0)
    aout_ref[...] = jnp.concatenate(a_rows, axis=0)


@jax.jit
def _fused_table_lookup(scalars, t_flat, betas_bcast, abar_bcast):
    """Gather betas[idx] and alphas_bar[idx] in a single pallas_call.

    scalars:     (2,) int32  [scale, max_idx]
    t_flat:      (B,) float32
    *_bcast:     (T1_pad, 128) float32 lane-broadcast tables
    returns:     ((B,) betas gather, (B,) alphas_bar gather), float32
    """
    B = t_flat.shape[0]
    T1_pad = betas_bcast.shape[0]

    rows = -(-B // LANES)
    rows_pad = -(-rows // R_TILE) * R_TILE
    B_pad = rows_pad * LANES
    n_steps = rows_pad // R_TILE

    t2d = jnp.pad(t_flat, (0, B_pad - B)).reshape(rows_pad, LANES)

    betas_out, abar_out = pl.pallas_call(
        _gather_kernel,
        out_shape=(jax.ShapeDtypeStruct((rows_pad, LANES), jnp.float32),
                   jax.ShapeDtypeStruct((rows_pad, LANES), jnp.float32)),
        grid_spec=pltpu.PrefetchScalarGridSpec(
            num_scalar_prefetch=1,
            grid=(n_steps,),
            in_specs=[
                # batch tile advances with the grid
                pl.BlockSpec((R_TILE, LANES), lambda i, s: (i, 0)),
                # tables: constant block index -> stay VMEM-resident, no re-DMA
                pl.BlockSpec((T1_pad, LANES), lambda i, s: (0, 0)),
                pl.BlockSpec((T1_pad, LANES), lambda i, s: (0, 0)),
            ],
            out_specs=[
                pl.BlockSpec((R_TILE, LANES), lambda i, s: (i, 0)),
                pl.BlockSpec((R_TILE, LANES), lambda i, s: (i, 0)),
            ],
        ),
        compiler_params=pltpu.CompilerParams(
            # shards steps across the 2 TensorCores on v7x when n_steps >= 2;
            # neutral (but harmless) on single-TC v5e/v6e.
            dimension_semantics=("parallel",)),
    )(scalars, t2d, betas_bcast, abar_bcast)

    return betas_out.reshape(-1)[:B], abar_out.reshape(-1)[:B]


class NoiseScheduleDiscrete:
    """JAX/Pallas port of torch_molecule DiGress NoiseScheduleDiscrete."""

    def __init__(self, timesteps):
        self.timesteps = timesteps

        betas_np = cosine_beta_schedule_discrete(timesteps).astype(np.float32)
        alphas_np = (1.0 - np.clip(betas_np, 0.0, 1.0)).astype(np.float32)
        abar_np = np.exp(np.cumsum(np.log(alphas_np))).astype(np.float32)

        # Public 1-D buffers (parity with the torch module).
        self.betas = jnp.asarray(betas_np)            # (timesteps + 1,)
        self.alphas = jnp.asarray(alphas_np)
        self.alphas_bar = jnp.asarray(abar_np)

        # Pre-padded, lane-broadcast tables built ONCE (hoisted out of forward).
        T1 = betas_np.shape[0]                        # timesteps + 1
        T1_pad = ((T1 + 7) // 8) * 8
        betas_b = np.zeros((T1_pad, LANES), np.float32)
        abar_b = np.zeros((T1_pad, LANES), np.float32)
        betas_b[:T1, :] = betas_np[:, None]
        abar_b[:T1, :] = abar_np[:, None]
        self._betas_bcast = jnp.asarray(betas_b)
        self._abar_bcast = jnp.asarray(abar_b)

        # SMEM scalar-prefetch payloads (shared compiled kernel for both paths).
        max_idx = T1 - 1                              # == timesteps
        self._scalars_norm = jnp.asarray([timesteps, max_idx], jnp.int32)
        self._scalars_int = jnp.asarray([1, max_idx], jnp.int32)

    # ---- internal helper ---------------------------------------------------
    def _lookup_both(self, t, scalars):
        t_arr = jnp.asarray(t, jnp.float32)
        orig_shape = t_arr.shape
        flat = t_arr.reshape(-1)
        b, a = _fused_table_lookup(scalars, flat,
                                   self._betas_bcast, self._abar_bcast)
        return b.reshape(orig_shape), a.reshape(orig_shape)

    # ---- public API (mirrors the PyTorch module) -----------------------------
    def forward(self, t_normalized=None, t_int=None):
        assert int(t_normalized is None) + int(t_int is None) == 1
        if t_int is None:
            return self._lookup_both(t_normalized, self._scalars_norm)[0]
        return self._lookup_both(t_int, self._scalars_int)[0]

    def get_alpha_bar(self, t_normalized=None, t_int=None):
        assert int(t_normalized is None) + int(t_int is None) == 1
        if t_int is None:
            return self._lookup_both(t_normalized, self._scalars_norm)[1]
        return self._lookup_both(t_int, self._scalars_int)[1]

    def forward_and_alpha_bar(self, t_normalized=None, t_int=None):
        """Fused path: betas[idx] and alphas_bar[idx] from ONE pallas_call."""
        assert int(t_normalized is None) + int(t_int is None) == 1
        if t_int is None:
            return self._lookup_both(t_normalized, self._scalars_norm)
        return self._lookup_both(t_int, self._scalars_int)


if __name__ == "__main__":
    timesteps = 100
    sched = NoiseScheduleDiscrete(timesteps)

    key = jax.random.PRNGKey(0)
    k1, k2, k3 = jax.random.split(key, 3)
    batch = 8
    t_norm = jax.random.uniform(k1, (batch,), dtype=jnp.float32)           # [0, 1)
    t_int = jax.random.randint(k2, (batch,), 0, timesteps + 1)
    t_norm_2d = jax.random.uniform(k3, (4, 1), dtype=jnp.float32)          # DiGress-style (bs, 1)
    t_int_big = jax.random.randint(k2, (1536,), 0, timesteps + 1)          # 12 rows -> 2 grid steps

    out_norm = jax.block_until_ready(sched.forward(t_normalized=t_norm))
    out_int = jax.block_until_ready(sched.forward(t_int=t_int))
    out_abar = jax.block_until_ready(sched.get_alpha_bar(t_int=t_int))
    fused_b, fused_a = sched.forward_and_alpha_bar(t_int=t_int)
    jax.block_until_ready((fused_b, fused_a))
    out_norm_2d = jax.block_until_ready(sched.forward(t_normalized=t_norm_2d))
    abar_norm_2d = jax.block_until_ready(sched.get_alpha_bar(t_normalized=t_norm_2d))
    big_b, big_a = sched.forward_and_alpha_bar(t_int=t_int_big)
    jax.block_until_ready((big_b, big_a))

    # reference (plain numpy, mirrors the PyTorch module, float32 like torch)
    betas_np = cosine_beta_schedule_discrete(timesteps).astype(np.float32)
    alphas_np = (1.0 - np.clip(betas_np, 0.0, 1.0)).astype(np.float32)
    abar_np = np.exp(np.cumsum(np.log(alphas_np))).astype(np.float32)

    idx_norm = np.round(np.asarray(t_norm) * timesteps).astype(np.int64)
    idx_norm_2d = np.round(np.asarray(t_norm_2d) * timesteps).astype(np.int64)
    idx_int = np.asarray(t_int)
    idx_big = np.asarray(t_int_big)

    np.testing.assert_allclose(np.asarray(out_norm), betas_np[idx_norm], rtol=1e-6, atol=1e-7)
    np.testing.assert_allclose(np.asarray(out_int), betas_np[idx_int], rtol=1e-6, atol=1e-7)
    np.testing.assert_allclose(np.asarray(out_abar), abar_np[idx_int], rtol=1e-6, atol=1e-6)
    np.testing.assert_allclose(np.asarray(fused_b), betas_np[idx_int], rtol=1e-6, atol=1e-7)
    np.testing.assert_allclose(np.asarray(fused_a), abar_np[idx_int], rtol=1e-6, atol=1e-6)
    np.testing.assert_allclose(np.asarray(out_norm_2d), betas_np[idx_norm_2d], rtol=1e-6, atol=1e-7)
    np.testing.assert_allclose(np.asarray(abar_norm_2d), abar_np[idx_norm_2d], rtol=1e-6, atol=1e-6)
    np.testing.assert_allclose(np.asarray(big_b), betas_np[idx_big], rtol=1e-6, atol=1e-7)
    np.testing.assert_allclose(np.asarray(big_a), abar_np[idx_big], rtol=1e-6, atol=1e-6)

    print("KERNEL_OK")
</pallas_src>

<mosaic_0001>
module attributes {stable_mosaic.version = 11 : i64} {
  func.func @_gather_kernel(%arg0: i32, %arg1: memref<2xi32, #tpu.memory_space<smem>>, %arg2: memref<8x128xf32, #tpu.memory_space<vmem>>, %arg3: memref<104x128xf32, #tpu.memory_space<vmem>>, %arg4: memref<104x128xf32, #tpu.memory_space<vmem>>, %arg5: memref<8x128xf32, #tpu.memory_space<vmem>>, %arg6: memref<8x128xf32, #tpu.memory_space<vmem>>) attributes {dimension_semantics = [#tpu.dimension_semantics<parallel>], iteration_bounds = array<i64: 1>, scalar_prefetch = 1 : i64, scratch_operands = 0 : i64, tpu.core_type = #tpu.core_type<tc>, window_params = [{transform_indices = @transform_0, window_bounds = array<i64: 8, 128>}, {pipeline_mode = #tpu.pipeline_mode<synchronous>, transform_indices = @transform_1, window_bounds = array<i64: 104, 128>}, {pipeline_mode = #tpu.pipeline_mode<synchronous>, transform_indices = @transform_2, window_bounds = array<i64: 104, 128>}, {transform_indices = @transform_3, window_bounds = array<i64: 8, 128>}, {transform_indices = @transform_4, window_bounds = array<i64: 8, 128>}]} {
    %c0 = arith.constant 0 : index
    %0 = memref.load %arg1[%c0] : memref<2xi32, #tpu.memory_space<smem>>
    %1 = arith.sitofp %0 : i32 to f32
    %c1 = arith.constant 1 : index
    %2 = memref.load %arg1[%c1] : memref<2xi32, #tpu.memory_space<smem>>
    %c0_0 = arith.constant 0 : index
    %c0_1 = arith.constant 0 : index
    %3 = vector.load %arg2[%c0_0, %c0_1] : memref<8x128xf32, #tpu.memory_space<vmem>>, vector<8x128xf32>
    %4 = vector.broadcast %1 : f32 to vector<8x128xf32>
    %5 = arith.mulf %3, %4 : vector<8x128xf32>
    %6 = math.roundeven %5 : vector<8x128xf32>
    %7 = arith.fptosi %6 : vector<8x128xf32> to vector<8x128xi32>
    %c0_i32 = arith.constant 0 : i32
    %8 = vector.broadcast %c0_i32 : i32 to vector<8x128xi32>
    %9 = arith.maxsi %8, %7 : vector<8x128xi32>
    %10 = vector.broadcast %2 : i32 to vector<8x128xi32>
    %11 = arith.minsi %10, %9 : vector<8x128xi32>
    %c0_2 = arith.constant 0 : index
    %c0_3 = arith.constant 0 : index
    %12 = vector.load %arg3[%c0_2, %c0_3] : memref<104x128xf32, #tpu.memory_space<vmem>>, vector<104x128xf32>
    %c0_4 = arith.constant 0 : index
    %c0_5 = arith.constant 0 : index
    %13 = vector.load %arg4[%c0_4, %c0_5] : memref<104x128xf32, #tpu.memory_space<vmem>>, vector<104x128xf32>
    %14 = tpu.iota {dimensions = array<i32: 0>} : vector<104x128xi32>
    %15 = vector.extract_strided_slice %11 {offsets = [0, 0], sizes = [1, 128], strides = [1, 1]} : vector<8x128xi32> to vector<1x128xi32>
    %16 = vector.broadcast %15 : vector<1x128xi32> to vector<104x128xi32>
    %17 = arith.cmpi eq, %14, %16 : vector<104x128xi32>
    %cst = arith.constant 0.000000e+00 : f32
    %18 = vector.broadcast %cst : f32 to vector<104x128xf32>
    %19 = arith.select %17, %12, %18 : vector<104x128xi1>, vector<104x128xf32>
    %cst_6 = arith.constant dense<0.000000e+00> : vector<128xf32>
    %20 = vector.multi_reduction <add>, %19, %cst_6 [0] : vector<104x128xf32> to vector<128xf32>
    %21 = vector.shape_cast %20 : vector<128xf32> to vector<1x128xf32>
    %cst_7 = arith.constant 0.000000e+00 : f32
    %22 = vector.broadcast %cst_7 : f32 to vector<104x128xf32>
    %23 = arith.select %17, %13, %22 : vector<104x128xi1>, vector<104x128xf32>
    %cst_8 = arith.constant dense<0.000000e+00> : vector<128xf32>
    %24 = vector.multi_reduction <add>, %23, %cst_8 [0] : vector<104x128xf32> to vector<128xf32>
    %25 = vector.shape_cast %24 : vector<128xf32> to vector<1x128xf32>
    %26 = vector.extract_strided_slice %11 {offsets = [1, 0], sizes = [1, 128], strides = [1, 1]} : vector<8x128xi32> to vector<1x128xi32>
    %27 = vector.broadcast %26 : vector<1x128xi32> to vector<104x128xi32>
    %28 = arith.cmpi eq, %14, %27 : vector<104x128xi32>
    %cst_9 = arith.constant 0.000000e+00 : f32
    %29 = vector.broadcast %cst_9 : f32 to vector<104x128xf32>
    %30 = arith.select %28, %12, %29 : vector<104x128xi1>, vector<104x128xf32>
    %cst_10 = arith.constant dense<0.000000e+00> : vector<128xf32>
    %31 = vector.multi_reduction <add>, %30, %cst_10 [0] : vector<104x128xf32> to vector<128xf32>
    %32 = vector.shape_cast %31 : vector<128xf32> to vector<1x128xf32>
    %cst_11 = arith.constant 0.000000e+00 : f32
    %33 = vector.broadcast %cst_11 : f32 to vector<104x128xf32>
    %34 = arith.select %28, %13, %33 : vector<104x128xi1>, vector<104x128xf32>
    %cst_12 = arith.constant dense<0.000000e+00> : vector<128xf32>
    %35 = vector.multi_reduction <add>, %34, %cst_12 [0] : vector<104x128xf32> to vector<128xf32>
    %36 = vector.shape_cast %35 : vector<128xf32> to vector<1x128xf32>
    %37 = vector.extract_strided_slice %11 {offsets = [2, 0], sizes = [1, 128], strides = [1, 1]} : vector<8x128xi32> to vector<1x128xi32>
    %38 = vector.broadcast %37 : vector<1x128xi32> to vector<104x128xi32>
    %39 = arith.cmpi eq, %14, %38 : vector<104x128xi32>
    %cst_13 = arith.constant 0.000000e+00 : f32
    %40 = vector.broadcast %cst_13 : f32 to vector<104x128xf32>
    %41 = arith.select %39, %12, %40 : vector<104x128xi1>, vector<104x128xf32>
    %cst_14 = arith.constant dense<0.000000e+00> : vector<128xf32>
    %42 = vector.multi_reduction <add>, %41, %cst_14 [0] : vector<104x128xf32> to vector<128xf32>
    %43 = vector.shape_cast %42 : vector<128xf32> to vector<1x128xf32>
    %cst_15 = arith.constant 0.000000e+00 : f32
    %44 = vector.broadcast %cst_15 : f32 to vector<104x128xf32>
    %45 = arith.select %39, %13, %44 : vector<104x128xi1>, vector<104x128xf32>
    %cst_16 = arith.constant dense<0.000000e+00> : vector<128xf32>
    %46 = vector.multi_reduction <add>, %45, %cst_16 [0] : vector<104x128xf32> to vector<128xf32>
    %47 = vector.shape_cast %46 : vector<128xf32> to vector<1x128xf32>
    %48 = vector.extract_strided_slice %11 {offsets = [3, 0], sizes = [1, 128], strides = [1, 1]} : vector<8x128xi32> to vector<1x128xi32>
    %49 = vector.broadcast %48 : vector<1x128xi32> to vector<104x128xi32>
    %50 = arith.cmpi eq, %14, %49 : vector<104x128xi32>
    %cst_17 = arith.constant 0.000000e+00 : f32
    %51 = vector.broadcast %cst_17 : f32 to vector<104x128xf32>
    %52 = arith.select %50, %12, %51 : vector<104x128xi1>, vector<104x128xf32>
    %cst_18 = arith.constant dense<0.000000e+00> : vector<128xf32>
    %53 = vector.multi_reduction <add>, %52, %cst_18 [0] : vector<104x128xf32> to vector<128xf32>
    %54 = vector.shape_cast %53 : vector<128xf32> to vector<1x128xf32>
    %cst_19 = arith.constant 0.000000e+00 : f32
    %55 = vector.broadcast %cst_19 : f32 to vector<104x128xf32>
    %56 = arith.select %50, %13, %55 : vector<104x128xi1>, vector<104x128xf32>
    %cst_20 = arith.constant dense<0.000000e+00> : vector<128xf32>
    %57 = vector.multi_reduction <add>, %56, %cst_20 [0] : vector<104x128xf32> to vector<128xf32>
    %58 = vector.shape_cast %57 : vector<128xf32> to vector<1x128xf32>
    %59 = vector.extract_strided_slice %11 {offsets = [4, 0], sizes = [1, 128], strides = [1, 1]} : vector<8x128xi32> to vector<1x128xi32>
    %60 = vector.broadcast %59 : vector<1x128xi32> to vector<104x128xi32>
    %61 = arith.cmpi eq, %14, %60 : vector<104x128xi32>
    %cst_21 = arith.constant 0.000000e+00 : f32
    %62 = vector.broadcast %cst_21 : f32 to vector<104x128xf32>
    %63 = arith.select %61, %12, %62 : vector<104x128xi1>, vector<104x128xf32>
    %cst_22 = arith.constant dense<0.000000e+00> : vector<128xf32>
    %64 = vector.multi_reduction <add>, %63, %cst_22 [0] : vector<104x128xf32> to vector<128xf32>
    %65 = vector.shape_cast %64 : vector<128xf32> to vector<1x128xf32>
    %cst_23 = arith.constant 0.000000e+00 : f32
    %66 = vector.broadcast %cst_23 : f32 to vector<104x128xf32>
    %67 = arith.select %61, %13, %66 : vector<104x128xi1>, vector<104x128xf32>
    %cst_24 = arith.constant dense<0.000000e+00> : vector<128xf32>
    %68 = vector.multi_reduction <add>, %67, %cst_24 [0] : vector<104x128xf32> to vector<128xf32>
    %69 = vector.shape_cast %68 : vector<128xf32> to vector<1x128xf32>
    %70 = vector.extract_strided_slice %11 {offsets = [5, 0], sizes = [1, 128], strides = [1, 1]} : vector<8x128xi32> to vector<1x128xi32>
    %71 = vector.broadcast %70 : vector<1x128xi32> to vector<104x128xi32>
    %72 = arith.cmpi eq, %14, %71 : vector<104x128xi32>
    %cst_25 = arith.constant 0.000000e+00 : f32
    %73 = vector.broadcast %cst_25 : f32 to vector<104x128xf32>
    %74 = arith.select %72, %12, %73 : vector<104x128xi1>, vector<104x128xf32>
    %cst_26 = arith.constant dense<0.000000e+00> : vector<128xf32>
    %75 = vector.multi_reduction <add>, %74, %cst_26 [0] : vector<104x128xf32> to vector<128xf32>
    %76 = vector.shape_cast %75 : vector<128xf32> to vector<1x128xf32>
    %cst_27 = arith.constant 0.000000e+00 : f32
    %77 = vector.broadcast %cst_27 : f32 to vector<104x128xf32>
    %78 = arith.select %72, %13, %77 : vector<104x128xi1>, vector<104x128xf32>
    %cst_28 = arith.constant dense<0.000000e+00> : vector<128xf32>
    %79 = vector.multi_reduction <add>, %78, %cst_28 [0] : vector<104x128xf32> to vector<128xf32>
    %80 = vector.shape_cast %79 : vector<128xf32> to vector<1x128xf32>
    %81 = vector.extract_strided_slice %11 {offsets = [6, 0], sizes = [1, 128], strides = [1, 1]} : vector<8x128xi32> to vector<1x128xi32>
    %82 = vector.broadcast %81 : vector<1x128xi32> to vector<104x128xi32>
    %83 = arith.cmpi eq, %14, %82 : vector<104x128xi32>
    %cst_29 = arith.constant 0.000000e+00 : f32
    %84 = vector.broadcast %cst_29 : f32 to vector<104x128xf32>
    %85 = arith.select %83, %12, %84 : vector<104x128xi1>, vector<104x128xf32>
    %cst_30 = arith.constant dense<0.000000e+00> : vector<128xf32>
    %86 = vector.multi_reduction <add>, %85, %cst_30 [0] : vector<104x128xf32> to vector<128xf32>
    %87 = vector.shape_cast %86 : vector<128xf32> to vector<1x128xf32>
    %cst_31 = arith.constant 0.000000e+00 : f32
    %88 = vector.broadcast %cst_31 : f32 to vector<104x128xf32>
    %89 = arith.select %83, %13, %88 : vector<104x128xi1>, vector<104x128xf32>
    %cst_32 = arith.constant dense<0.000000e+00> : vector<128xf32>
    %90 = vector.multi_reduction <add>, %89, %cst_32 [0] : vector<104x128xf32> to vector<128xf32>
    %91 = vector.shape_cast %90 : vector<128xf32> to vector<1x128xf32>
    %92 = vector.extract_strided_slice %11 {offsets = [7, 0], sizes = [1, 128], strides = [1, 1]} : vector<8x128xi32> to vector<1x128xi32>
    %93 = vector.broadcast %92 : vector<1x128xi32> to vector<104x128xi32>
    %94 = arith.cmpi eq, %14, %93 : vector<104x128xi32>
    %cst_33 = arith.constant 0.000000e+00 : f32
    %95 = vector.broadcast %cst_33 : f32 to vector<104x128xf32>
    %96 = arith.select %94, %12, %95 : vector<104x128xi1>, vector<104x128xf32>
    %cst_34 = arith.constant dense<0.000000e+00> : vector<128xf32>
    %97 = vector.multi_reduction <add>, %96, %cst_34 [0] : vector<104x128xf32> to vector<128xf32>
    %98 = vector.shape_cast %97 : vector<128xf32> to vector<1x128xf32>
    %cst_35 = arith.constant 0.000000e+00 : f32
    %99 = vector.broadcast %cst_35 : f32 to vector<104x128xf32>
    %100 = arith.select %94, %13, %99 : vector<104x128xi1>, vector<104x128xf32>
    %cst_36 = arith.constant dense<0.000000e+00> : vector<128xf32>
    %101 = vector.multi_reduction <add>, %100, %cst_36 [0] : vector<104x128xf32> to vector<128xf32>
    %102 = vector.shape_cast %101 : vector<128xf32> to vector<1x128xf32>
    %103 = tpu.concatenate %21, %32, %43, %54, %65, %76, %87, %98 in 0 : vector<1x128xf32>, vector<1x128xf32>, vector<1x128xf32>, vector<1x128xf32>, vector<1x128xf32>, vector<1x128xf32>, vector<1x128xf32>, vector<1x128xf32> -> vector<8x128xf32>
    %c0_37 = arith.constant 0 : index
    %c0_38 = arith.constant 0 : index
    %104 = vector.load %arg5[%c0_37, %c0_38] : memref<8x128xf32, #tpu.memory_space<vmem>>, vector<8x128xf32>
    tpu.vector_store %arg5[%c0_37, %c0_38], %103 {strides = array<i32>} : memref<8x128xf32, #tpu.memory_space<vmem>>, vector<8x128xf32>,
    %105 = tpu.concatenate %25, %36, %47, %58, %69, %80, %91, %102 in 0 : vector<1x128xf32>, vector<1x128xf32>, vector<1x128xf32>, vector<1x128xf32>, vector<1x128xf32>, vector<1x128xf32>, vector<1x128xf32>, vector<1x128xf32> -> vector<8x128xf32>
    %c0_39 = arith.constant 0 : index
    %c0_40 = arith.constant 0 : index
    %106 = vector.load %arg6[%c0_39, %c0_40] : memref<8x128xf32, #tpu.memory_space<vmem>>, vector<8x128xf32>
    tpu.vector_store %arg6[%c0_39, %c0_40], %105 {strides = array<i32>} : memref<8x128xf32, #tpu.memory_space<vmem>>, vector<8x128xf32>,
    return
  }
  func.func @transform_0(%arg0: i32, %arg1: memref<2xi32, #tpu.memory_space<smem>>) -> (i32, i32) {
    %c0_i32 = arith.constant 0 : i32
    %c0_i32_0 = arith.constant 0 : i32
    return %arg0, %c0_i32 : i32, i32
  }
  func.func @transform_1(%arg0: i32, %arg1: memref<2xi32, #tpu.memory_space<smem>>) -> (i32, i32) {
    %c0_i32 = arith.constant 0 : i32
    %c0_i32_0 = arith.constant 0 : i32
    %c0_i32_1 = arith.constant 0 : i32
    return %c0_i32, %c0_i32_0 : i32, i32
  }
  func.func @transform_2(%arg0: i32, %arg1: memref<2xi32, #tpu.memory_space<smem>>) -> (i32, i32) {
    %c0_i32 = arith.constant 0 : i32
    %c0_i32_0 = arith.constant 0 : i32
    %c0_i32_1 = arith.constant 0 : i32
    return %c0_i32, %c0_i32_0 : i32, i32
  }
  func.func @transform_3(%arg0: i32, %arg1: memref<2xi32, #tpu.memory_space<smem>>) -> (i32, i32) {
    %c0_i32 = arith.constant 0 : i32
    %c0_i32_0 = arith.constant 0 : i32
    return %arg0, %c0_i32 : i32, i32
  }
  func.func @transform_4(%arg0: i32, %arg1: memref<2xi32, #tpu.memory_space<smem>>) -> (i32, i32) {
    %c0_i32 = arith.constant 0 : i32
    %c0_i32_0 = arith.constant 0 : i32
    return %arg0, %c0_i32 : i32, i32
  }
}

</mosaic_0001>

<llo_original>
// kernel: _fused_table_lookup.1
$region0: #{_fused_table_lookup.1}
  #allocation0 [shape = 'u32[]', space=smem, size = 0x4, offset = 0x4, fixed_abs, tag = 'smem constant byte address 0x4 - core index']
  #allocation1 [shape = 'u32[144,128]{1,0:T(1,128)}', space=vmem, size = 0x12000, scoped, tag = 'internal scratch']
  #allocation2 [shape = 's32[1]{0}', space=sflag, size = 0x4, scoped, tag = 'scoped memory for _fused_table_lookup.1']
  #allocation3 [shape = 'u8[512]{0}', space=smem, size = 0x200, scoped, tag = 'prefetched SMEM operand 0']
  %s0 = inlined_call_operand.vmem [shape: s32[2], index: 0, kind: input, shape index: {}]
  %s1 = inlined_call_operand.vmem [shape: f32[8,128], index: 1, kind: input, shape index: {}]
  %s2 = inlined_call_operand.hbm [shape: f32[104,128], index: 2, kind: input, shape index: {}]
  %s3 = inlined_call_operand.hbm [shape: f32[104,128], index: 3, kind: input, shape index: {}]
  %s4 = inlined_call_operand.vmem [shape: f32[8,128], index: 4, kind: output, shape index: {0}]
  %s5 = inlined_call_operand.vmem [shape: f32[8,128], index: 5, kind: output, shape index: {1}]
  %6 = xla_tuple %s4, %s5
  %s7 = sld [smem:[#allocation0]]
  $region38: #{_fused_table_lookup.1} parent=0
    _
  %s9 = ssub.s32 1, %s7
  %s10 = scalar_select 0, %s9, %s7
  %s11 = sshll.u32 %s0, 4
  %s12 = int_to_ptr.vmem [resolvable:$true] %s11
  %14 = dma.vmem_to_smem %s12, 16, [#allocation3], [#allocation2]
  %15 = dma.done [#allocation2], 16
  %16 = sfence
  $region1: #{_fused_table_lookup.1} parent=0
    #allocation4 [shape = 'u8[53248]{0}', space=vmem, size = 0xd000, scoped, tag = 'input window, operand 2, single buffered']
    #allocation5 [shape = 's32[1]{0}', space=sflag, size = 0x4, scoped, tag = 'scoped memory for _fused_table_lookup.1']
    #allocation6 [shape = 'u8[53248]{0}', space=vmem, size = 0xd000, scoped, tag = 'input window, operand 3, single buffered']
    #allocation7 [shape = 's32[1]{0}', space=sflag, size = 0x4, scoped, tag = 'scoped memory for _fused_table_lookup.1']
    %17 = vsyncpa [#allocation5], 0
    %18 = vsyncpa [#allocation7], 0
    // Predicated region
    $region2: #{_fused_table_lookup.1} parent=1 // pred_check
      _
    $region3: #{_fused_table_lookup.1} parent=1 // pred_check_branch
      %20 = sbr.rel (0) target = $region5
    $region4: #{_fused_table_lookup.1} parent=1 // pred_region
      _
    $region5: #{_fused_table_lookup.1} parent=1 // pred_fallthru
      _
    // Predicated region
    $region6: #{_fused_table_lookup.1} parent=1 // pred_check
      _
    $region7: #{_fused_table_lookup.1} parent=1 // pred_check_branch
      %22 = sbr.rel (0) target = $region9
    $region8: #{_fused_table_lookup.1} parent=1 // pred_region
      %s24 = ssub.s32 1664, 1664
      %25 = vsyncadd [#allocation5], %s24
      %s26 = sshll.u32 [#allocation4], 4
      %s27 = int_to_ptr.vmem [resolvable:$true] %s26
      %32 = dma.hbm_to_vmem [thread:$0]  %s2, 1664, %s27, [#allocation5], 128, 128, 8
    $region9: #{_fused_table_lookup.1} parent=1 // pred_fallthru
      _
    // Predicated region
    $region10: #{_fused_table_lookup.1} parent=1 // pred_check
      _
    $region11: #{_fused_table_lookup.1} parent=1 // pred_check_branch
      %34 = sbr.rel (0) target = $region13
    $region12: #{_fused_table_lookup.1} parent=1 // pred_region
      %s36 = ssub.s32 1664, 1664
      %37 = vsyncadd [#allocation7], %s36
      %s38 = sshll.u32 [#allocation6], 4
      %s39 = int_to_ptr.vmem [resolvable:$true] %s38
      %44 = dma.hbm_to_vmem [thread:$0]  %s3, 1664, %s39, [#allocation7], 128, 128, 8
    $region13: #{_fused_table_lookup.1} parent=1 // pred_fallthru
      _
    // Predicated region
    $region14: #{_fused_table_lookup.1} parent=1 // pred_check
      _
    $region15: #{_fused_table_lookup.1} parent=1 // pred_check_branch
      %46 = sbr.rel (0) target = $region17
    $region16: #{_fused_table_lookup.1} parent=1 // pred_region
      %47 = dma.done [#allocation5], 1664
    $region17: #{_fused_table_lookup.1} parent=1 // pred_fallthru
      _
    // Predicated region
    $region18: #{_fused_table_lookup.1} parent=1 // pred_check
      _
    $region19: #{_fused_table_lookup.1} parent=1 // pred_check_branch
      %49 = sbr.rel (0) target = $region21
    $region20: #{_fused_table_lookup.1} parent=1 // pred_region
      %50 = dma.done [#allocation7], 1664
    $region21: #{_fused_table_lookup.1} parent=1 // pred_fallthru
      _
    %s51 = sld [smem:[#allocation3]]
    %s52 = scvt.s32.f32 %s51
    %s53 = sld [smem:[#allocation3 + $0x1]]
    %v54 = vld [vmem:[%s1] sm:$0xff]
    %v55 = vstv %s52
    %v56 = vmul.f32 %v54, %v55
    %v57 = vcvt.f32.s32.ties.to.even %v56
    %vm58 = vcmp.gt.s32.totalorder %v57, 0
    %v59 = vsel %vm58, %v57, 0
    %v60 = vstv %s53
    %vm61 = vcmp.lt.s32.totalorder %v60, %v59
    %v62 = vsel %vm61, %v60, %v59
    %v63 = vld [vmem:[#allocation4] sm:$0xff]
    %v64 = vld [vmem:[#allocation4 + $0x8] sm:$0xff]
    %v65 = vld [vmem:[#allocation4 + $0x10] sm:$0xff]
    %v66 = vld [vmem:[#allocation4 + $0x18] sm:$0xff]
    %v67 = vld [vmem:[#allocation4 + $0x20] sm:$0xff]
    %v68 = vld [vmem:[#allocation4 + $0x28] sm:$0xff]
    %v69 = vld [vmem:[#allocation4 + $0x30] sm:$0xff]
    %v70 = vld [vmem:[#allocation4 + $0x38] sm:$0xff]
    %v71 = vld [vmem:[#allocation4 + $0x40] sm:$0xff]
    %v72 = vld [vmem:[#allocation4 + $0x48] sm:$0xff]
    %v73 = vld [vmem:[#allocation4 + $0x50] sm:$0xff]
    %v74 = vld [vmem:[#allocation4 + $0x58] sm:$0xff]
    %v75 = vld [vmem:[#allocation4 + $0x60] sm:$0xff]
    %v76 = vld [vmem:[#allocation6] sm:$0xff]
    %v77 = vld [vmem:[#allocation6 + $0x8] sm:$0xff]
    %v78 = vld [vmem:[#allocation6 + $0x10] sm:$0xff]
    %v79 = vld [vmem:[#allocation6 + $0x18] sm:$0xff]
    %v80 = vld [vmem:[#allocation6 + $0x20] sm:$0xff]
    %v81 = vld [vmem:[#allocation6 + $0x28] sm:$0xff]
    %v82 = vld [vmem:[#allocation6 + $0x30] sm:$0xff]
    %v83 = vld [vmem:[#allocation6 + $0x38] sm:$0xff]
    %v84 = vld [vmem:[#allocation6 + $0x40] sm:$0xff]
    %v85 = vld [vmem:[#allocation6 + $0x48] sm:$0xff]
    %v86 = vld [vmem:[#allocation6 + $0x50] sm:$0xff]
    %v87 = vld [vmem:[#allocation6 + $0x58] sm:$0xff]
    %v88 = vld [vmem:[#allocation6 + $0x60] sm:$0xff]
    %v89 = vlaneseq
    %v90 = vshrl.u32 %v89, 7
    %v91 = vadd.s32 %v90, 8
    %v92 = vadd.s32 %v90, 16
    %v93 = vadd.s32 %v90, 24
    %v94 = vadd.s32 %v90, 32
    %v95 = vadd.s32 %v90, 40
    %v96 = vadd.s32 %v90, 48
    %v97 = vadd.s32 %v90, 56
    %v98 = vadd.s32 %v90, 64
    %v99 = vadd.s32 %v90, 72
    %v100 = vadd.s32 %v90, 80
    %v101 = vadd.s32 %v90, 88
    %v102 = vadd.s32 %v90, 96
    %v103 = vlaneseq
    %v104 = vshrl.u32 %v103, 7
    %v105 = vsub.s32 0, %v104
    %v106 = vrot.slane %v62, %v105
    %vm107 = vcmp.eq.s32.totalorder %v90, %v106
    %vm108 = vcmp.eq.s32.totalorder %v91, %v106
    %vm109 = vcmp.eq.s32.totalorder %v92, %v106
    %vm110 = vcmp.eq.s32.totalorder %v93, %v106
    %vm111 = vcmp.eq.s32.totalorder %v94, %v106
    %vm112 = vcmp.eq.s32.totalorder %v95, %v106
    %vm113 = vcmp.eq.s32.totalorder %v96, %v106
    %vm114 = vcmp.eq.s32.totalorder %v97, %v106
    %vm115 = vcmp.eq.s32.totalorder %v98, %v106
    %vm116 = vcmp.eq.s32.totalorder %v99, %v106
    %vm117 = vcmp.eq.s32.totalorder %v100, %v106
    %vm118 = vcmp.eq.s32.totalorder %v101, %v106
    %vm119 = vcmp.eq.s32.totalorder %v102, %v106
    %v120 = vsel %vm107, %v63, 0.0
    %v121 = vsel %vm108, %v64, 0.0
    %v122 = vsel %vm109, %v65, 0.0
    %v123 = vsel %vm110, %v66, 0.0
    %v124 = vsel %vm111, %v67, 0.0
    %v125 = vsel %vm112, %v68, 0.0
    %v126 = vsel %vm113, %v69, 0.0
    %v127 = vsel %vm114, %v70, 0.0
    %v128 = vsel %vm115, %v71, 0.0
    %v129 = vsel %vm116, %v72, 0.0
    %v130 = vsel %vm117, %v73, 0.0
    %v131 = vsel %vm118, %v74, 0.0
    %v132 = vsel %vm119, %v75, 0.0
    %v133 = vadd.f32 %v120, %v121
    %v134 = vadd.f32 %v133, %v122
    %v135 = vadd.f32 %v134, %v123
    %v136 = vadd.f32 %v135, %v124
    %v137 = vadd.f32 %v136, %v125
    %v138 = vadd.f32 %v137, %v126
    %v139 = vadd.f32 %v138, %v127
    %v140 = vadd.f32 %v139, %v128
    %v141 = vadd.f32 %v140, %v129
    %v142 = vadd.f32 %v141, %v130
    %v143 = vadd.f32 %v142, %v131
    %v144 = vadd.f32 %v143, %v132
    %v145 = vrot.slane %v144, 4
    %v146 = vadd.f32 %v144, %v145
    %v147 = vrot.slane %v146, 2
    %v148 = vadd.f32 %v146, %v147
    %v149 = vrot.slane %v148, 1
    %v150 = vadd.f32 %v148, %v149
    %v151 = vsel %vm107, %v76, 0.0
    %v152 = vsel %vm108, %v77, 0.0
    %v153 = vsel %vm109, %v78, 0.0
    %v154 = vsel %vm110, %v79, 0.0
    %v155 = vsel %vm111, %v80, 0.0
    %v156 = vsel %vm112, %v81, 0.0
    %v157 = vsel %vm113, %v82, 0.0
    %v158 = vsel %vm114, %v83, 0.0
    %v159 = vsel %vm115, %v84, 0.0
    %v160 = vsel %vm116, %v85, 0.0
    %v161 = vsel %vm117, %v86, 0.0
    %v162 = vsel %vm118, %v87, 0.0
    %v163 = vsel %vm119, %v88, 0.0
    %v164 = vadd.f32 %v151, %v152
    %v165 = vadd.f32 %v164, %v153
    %v166 = vadd.f32 %v165, %v154
    %v167 = vadd.f32 %v166, %v155
    %v168 = vadd.f32 %v167, %v156
    %v169 = vadd.f32 %v168, %v157
    %v170 = vadd.f32 %v169, %v158
    %v171 = vadd.f32 %v170, %v159
    %v172 = vadd.f32 %v171, %v160
    %v173 = vadd.f32 %v172, %v161
    %v174 = vadd.f32 %v173, %v162
    %v175 = vadd.f32 %v174, %v163
    %v176 = vrot.slane %v175, 4
    %v177 = vadd.f32 %v175, %v176
    %v178 = vrot.slane %v177, 2
    %v179 = vadd.f32 %v177, %v178
    %v180 = vrot.slane %v179, 1
    %v181 = vadd.f32 %v179, %v180
    %v182 = vlaneseq
    %v183 = vshrl.u32 %v182, 7
    %v184 = vsub.s32 1, %v183
    %v185 = vrot.slane %v62, %v184
    %vm186 = vcmp.eq.s32.totalorder %v90, %v185
    %vm187 = vcmp.eq.s32.totalorder %v91, %v185
    %vm188 = vcmp.eq.s32.totalorder %v92, %v185
    %vm189 = vcmp.eq.s32.totalorder %v93, %v185
    %vm190 = vcmp.eq.s32.totalorder %v94, %v185
    %vm191 = vcmp.eq.s32.totalorder %v95, %v185
    %vm192 = vcmp.eq.s32.totalorder %v96, %v185
    %vm193 = vcmp.eq.s32.totalorder %v97, %v185
    %vm194 = vcmp.eq.s32.totalorder %v98, %v185
    %vm195 = vcmp.eq.s32.totalorder %v99, %v185
    %vm196 = vcmp.eq.s32.totalorder %v100, %v185
    %vm197 = vcmp.eq.s32.totalorder %v101, %v185
    %vm198 = vcmp.eq.s32.totalorder %v102, %v185
    %v199 = vsel %vm186, %v63, 0.0
    %v200 = vsel %vm187, %v64, 0.0
    %v201 = vsel %vm188, %v65, 0.0
    %v202 = vsel %vm189, %v66, 0.0
    %v203 = vsel %vm190, %v67, 0.0
    %v204 = vsel %vm191, %v68, 0.0
    %v205 = vsel %vm192, %v69, 0.0
    %v206 = vsel %vm193, %v70, 0.0
    %v207 = vsel %vm194, %v71, 0.0
    %v208 = vsel %vm195, %v72, 0.0
    %v209 = vsel %vm196, %v73, 0.0
    %v210 = vsel %vm197, %v74, 0.0
    %v211 = vsel %vm198, %v75, 0.0
    %v212 = vadd.f32 %v199, %v200
    %v213 = vadd.f32 %v212, %v201
    %v214 = vadd.f32 %v213, %v202
    %v215 = vadd.f32 %v214, %v203
    %v216 = vadd.f32 %v215, %v204
    %v217 = vadd.f32 %v216, %v205
    %v218 = vadd.f32 %v217, %v206
    %v219 = vadd.f32 %v218, %v207
    %v220 = vadd.f32 %v219, %v208
    %v221 = vadd.f32 %v220, %v209
    %v222 = vadd.f32 %v221, %v210
    %v223 = vadd.f32 %v222, %v211
    %v224 = vrot.slane %v223, 4
    %v225 = vadd.f32 %v223, %v224
    %v226 = vrot.slane %v225, 2
    %v227 = vadd.f32 %v225, %v226
    %v228 = vrot.slane %v227, 1
    %v229 = vadd.f32 %v227, %v228
    %v230 = vsel %vm186, %v76, 0.0
    %v231 = vsel %vm187, %v77, 0.0
    %v232 = vsel %vm188, %v78, 0.0
    %v233 = vsel %vm189, %v79, 0.0
    %v234 = vsel %vm190, %v80, 0.0
    %v235 = vsel %vm191, %v81, 0.0
    %v236 = vsel %vm192, %v82, 0.0
    %v237 = vsel %vm193, %v83, 0.0
    %v238 = vsel %vm194, %v84, 0.0
    %v239 = vsel %vm195, %v85, 0.0
    %v240 = vsel %vm196, %v86, 0.0
    %v241 = vsel %vm197, %v87, 0.0
    %v242 = vsel %vm198, %v88, 0.0
    %v243 = vadd.f32 %v230, %v231
    %v244 = vadd.f32 %v243, %v232
    %v245 = vadd.f32 %v244, %v233
    %v246 = vadd.f32 %v245, %v234
    %v247 = vadd.f32 %v246, %v235
    %v248 = vadd.f32 %v247, %v236
    %v249 = vadd.f32 %v248, %v237
    %v250 = vadd.f32 %v249, %v238
    %v251 = vadd.f32 %v250, %v239
    %v252 = vadd.f32 %v251, %v240
    %v253 = vadd.f32 %v252, %v241
    %v254 = vadd.f32 %v253, %v242
    %v255 = vrot.slane %v254, 4
    %v256 = vadd.f32 %v254, %v255
    %v257 = vrot.slane %v256, 2
    %v258 = vadd.f32 %v256, %v257
    %v259 = vrot.slane %v258, 1
    %v260 = vadd.f32 %v258, %v259
    %v261 = vlaneseq
    %v262 = vshrl.u32 %v261, 7
    %v263 = vsub.s32 2, %v262
    %v264 = vrot.slane %v62, %v263
    %vm265 = vcmp.eq.s32.totalorder %v90, %v264
    %vm266 = vcmp.eq.s32.totalorder %v91, %v264
    %vm267 = vcmp.eq.s32.totalorder %v92, %v264
    %vm268 = vcmp.eq.s32.totalorder %v93, %v264
    %vm269 = vcmp.eq.s32.totalorder %v94, %v264
    %vm270 = vcmp.eq.s32.totalorder %v95, %v264
    %vm271 = vcmp.eq.s32.totalorder %v96, %v264
    %vm272 = vcmp.eq.s32.totalorder %v97, %v264
    %vm273 = vcmp.eq.s32.totalorder %v98, %v264
    %vm274 = vcmp.eq.s32.totalorder %v99, %v264
    %vm275 = vcmp.eq.s32.totalorder %v100, %v264
    %vm276 = vcmp.eq.s32.totalorder %v101, %v264
    %vm277 = vcmp.eq.s32.totalorder %v102, %v264
    %v278 = vsel %vm265, %v63, 0.0
    %v279 = vsel %vm266, %v64, 0.0
    %v280 = vsel %vm267, %v65, 0.0
    %v281 = vsel %vm268, %v66, 0.0
    %v282 = vsel %vm269, %v67, 0.0
    %v283 = vsel %vm270, %v68, 0.0
    %v284 = vsel %vm271, %v69, 0.0
    %v285 = vsel %vm272, %v70, 0.0
    %v286 = vsel %vm273, %v71, 0.0
    %v287 = vsel %vm274, %v72, 0.0
    %v288 = vsel %vm275, %v73, 0.0
    %v289 = vsel %vm276, %v74, 0.0
    %v290 = vsel %vm277, %v75, 0.0
    %v291 = vadd.f32 %v278, %v279
    %v292 = vadd.f32 %v291, %v280
    %v293 = vadd.f32 %v292, %v281
    %v294 = vadd.f32 %v293, %v282
    %v295 = vadd.f32 %v294, %v283
    %v296 = vadd.f32 %v295, %v284
    %v297 = vadd.f32 %v296, %v285
    %v298 = vadd.f32 %v297, %v286
    %v299 = vadd.f32 %v298, %v287
    %v300 = vadd.f32 %v299, %v288
    %v301 = vadd.f32 %v300, %v289
    %v302 = vadd.f32 %v301, %v290
    %v303 = vrot.slane %v302, 4
    %v304 = vadd.f32 %v302, %v303
    %v305 = vrot.slane %v304, 2
    %v306 = vadd.f32 %v304, %v305
    %v307 = vrot.slane %v306, 1
    %v308 = vadd.f32 %v306, %v307
    %v309 = vsel %vm265, %v76, 0.0
    %v310 = vsel %vm266, %v77, 0.0
    %v311 = vsel %vm267, %v78, 0.0
    %v312 = vsel %vm268, %v79, 0.0
    %v313 = vsel %vm269, %v80, 0.0
    %v314 = vsel %vm270, %v81, 0.0
    %v315 = vsel %vm271, %v82, 0.0
    %v316 = vsel %vm272, %v83, 0.0
    %v317 = vsel %vm273, %v84, 0.0
    %v318 = vsel %vm274, %v85, 0.0
    %v319 = vsel %vm275, %v86, 0.0
    %v320 = vsel %vm276, %v87, 0.0
    %v321 = vsel %vm277, %v88, 0.0
    %v322 = vadd.f32 %v309, %v310
    %v323 = vadd.f32 %v322, %v311
    %v324 = vadd.f32 %v323, %v312
    %v325 = vadd.f32 %v324, %v313
    %v326 = vadd.f32 %v325, %v314
    %v327 = vadd.f32 %v326, %v315
    %v328 = vadd.f32 %v327, %v316
    %v329 = vadd.f32 %v328, %v317
    %v330 = vadd.f32 %v329, %v318
    %v331 = vadd.f32 %v330, %v319
    %v332 = vadd.f32 %v331, %v320
    %v333 = vadd.f32 %v332, %v321
    %v334 = vrot.slane %v333, 4
    %v335 = vadd.f32 %v333, %v334
    %v336 = vrot.slane %v335, 2
    %v337 = vadd.f32 %v335, %v336
    %v338 = vrot.slane %v337, 1
    %v339 = vadd.f32 %v337, %v338
    %v340 = vlaneseq
    %v341 = vshrl.u32 %v340, 7
    %v342 = vsub.s32 3, %v341
    %v343 = vrot.slane %v62, %v342
    %vm344 = vcmp.eq.s32.totalorder %v90, %v343
    %vm345 = vcmp.eq.s32.totalorder %v91, %v343
    %vm346 = vcmp.eq.s32.totalorder %v92, %v343
    %vm347 = vcmp.eq.s32.totalorder %v93, %v343
    %vm348 = vcmp.eq.s32.totalorder %v94, %v343
    %vm349 = vcmp.eq.s32.totalorder %v95, %v343
    %vm350 = vcmp.eq.s32.totalorder %v96, %v343
    %vm351 = vcmp.eq.s32.totalorder %v97, %v343
    %vm352 = vcmp.eq.s32.totalorder %v98, %v343
    %vm353 = vcmp.eq.s32.totalorder %v99, %v343
    %vm354 = vcmp.eq.s32.totalorder %v100, %v343
    %vm355 = vcmp.eq.s32.totalorder %v101, %v343
    %vm356 = vcmp.eq.s32.totalorder %v102, %v343
    %v357 = vsel %vm344, %v63, 0.0
    %v358 = vsel %vm345, %v64, 0.0
    %v359 = vsel %vm346, %v65, 0.0
    %v360 = vsel %vm347, %v66, 0.0
    %v361 = vsel %vm348, %v67, 0.0
    %v362 = vsel %vm349, %v68, 0.0
    %v363 = vsel %vm350, %v69, 0.0
    %v364 = vsel %vm351, %v70, 0.0
    %v365 = vsel %vm352, %v71, 0.0
    %v366 = vsel %vm353, %v72, 0.0
    %v367 = vsel %vm354, %v73, 0.0
    %v368 = vsel %vm355, %v74, 0.0
    %v369 = vsel %vm356, %v75, 0.0
    %v370 = vadd.f32 %v357, %v358
    %v371 = vadd.f32 %v370, %v359
    %v372 = vadd.f32 %v371, %v360
    %v373 = vadd.f32 %v372, %v361
    %v374 = vadd.f32 %v373, %v362
    %v375 = vadd.f32 %v374, %v363
    %v376 = vadd.f32 %v375, %v364
    %v377 = vadd.f32 %v376, %v365
    %v378 = vadd.f32 %v377, %v366
    %v379 = vadd.f32 %v378, %v367
    %v380 = vadd.f32 %v379, %v368
    %v381 = vadd.f32 %v380, %v369
    %v382 = vrot.slane %v381, 4
    %v383 = vadd.f32 %v381, %v382
    %v384 = vrot.slane %v383, 2
    %v385 = vadd.f32 %v383, %v384
    %v386 = vrot.slane %v385, 1
    %v387 = vadd.f32 %v385, %v386
    %v388 = vsel %vm344, %v76, 0.0
    %v389 = vsel %vm345, %v77, 0.0
    %v390 = vsel %vm346, %v78, 0.0
    %v391 = vsel %vm347, %v79, 0.0
    %v392 = vsel %vm348, %v80, 0.0
    %v393 = vsel %vm349, %v81, 0.0
    %v394 = vsel %vm350, %v82, 0.0
    %v395 = vsel %vm351, %v83, 0.0
    %v396 = vsel %vm352, %v84, 0.0
    %v397 = vsel %vm353, %v85, 0.0
    %v398 = vsel %vm354, %v86, 0.0
    %v399 = vsel %vm355, %v87, 0.0
    %v400 = vsel %vm356, %v88, 0.0
    %v401 = vadd.f32 %v388, %v389
    %v402 = vadd.f32 %v401, %v390
    %v403 = vadd.f32 %v402, %v391
    %v404 = vadd.f32 %v403, %v392
    %v405 = vadd.f32 %v404, %v393
    %v406 = vadd.f32 %v405, %v394
    %v407 = vadd.f32 %v406, %v395
    %v408 = vadd.f32 %v407, %v396
    %v409 = vadd.f32 %v408, %v397
    %v410 = vadd.f32 %v409, %v398
    %v411 = vadd.f32 %v410, %v399
    %v412 = vadd.f32 %v411, %v400
    %v413 = vrot.slane %v412, 4
    %v414 = vadd.f32 %v412, %v413
    %v415 = vrot.slane %v414, 2
    %v416 = vadd.f32 %v414, %v415
    %v417 = vrot.slane %v416, 1
    %v418 = vadd.f32 %v416, %v417
    %v419 = vlaneseq
    %v420 = vshrl.u32 %v419, 7
    %v421 = vsub.s32 4, %v420
    %v422 = vrot.slane %v62, %v421
    %vm423 = vcmp.eq.s32.totalorder %v90, %v422
    %vm424 = vcmp.eq.s32.totalorder %v91, %v422
    %vm425 = vcmp.eq.s32.totalorder %v92, %v422
    %vm426 = vcmp.eq.s32.totalorder %v93, %v422
    %vm427 = vcmp.eq.s32.totalorder %v94, %v422
    %vm428 = vcmp.eq.s32.totalorder %v95, %v422
    %vm429 = vcmp.eq.s32.totalorder %v96, %v422
    %vm430 = vcmp.eq.s32.totalorder %v97, %v422
    %vm431 = vcmp.eq.s32.totalorder %v98, %v422
    %vm432 = vcmp.eq.s32.totalorder %v99, %v422
    %vm433 = vcmp.eq.s32.totalorder %v100, %v422
    %vm434 = vcmp.eq.s32.totalorder %v101, %v422
    %vm435 = vcmp.eq.s32.totalorder %v102, %v422
    %v436 = vsel %vm423, %v63, 0.0
    %v437 = vsel %vm424, %v64, 0.0
    %v438 = vsel %vm425, %v65, 0.0
    %v439 = vsel %vm426, %v66, 0.0
    %v440 = vsel %vm427, %v67, 0.0
    %v441 = vsel %vm428, %v68, 0.0
    %v442 = vsel %vm429, %v69, 0.0
    %v443 = vsel %vm430, %v70, 0.0
    %v444 = vsel %vm431, %v71, 0.0
    %v445 = vsel %vm432, %v72, 0.0
    %v446 = vsel %vm433, %v73, 0.0
    %v447 = vsel %vm434, %v74, 0.0
    %v448 = vsel %vm435, %v75, 0.0
    %v449 = vadd.f32 %v436, %v437
    %v450 = vadd.f32 %v449, %v438
    %v451 = vadd.f32 %v450, %v439
    %v452 = vadd.f32 %v451, %v440
    %v453 = vadd.f32 %v452, %v441
    %v454 = vadd.f32 %v453, %v442
    %v455 = vadd.f32 %v454, %v443
    %v456 = vadd.f32 %v455, %v444
    %v457 = vadd.f32 %v456, %v445
    %v458 = vadd.f32 %v457, %v446
    %v459 = vadd.f32 %v458, %v447
    %v460 = vadd.f32 %v459, %v448
    %v461 = vrot.slane %v460, 4
    %v462 = vadd.f32 %v460, %v461
    %v463 = vrot.slane %v462, 2
    %v464 = vadd.f32 %v462, %v463
    %v465 = vrot.slane %v464, 1
    %v466 = vadd.f32 %v464, %v465
    %v467 = vsel %vm423, %v76, 0.0
    %v468 = vsel %vm424, %v77, 0.0
    %v469 = vsel %vm425, %v78, 0.0
    %v470 = vsel %vm426, %v79, 0.0
    %v471 = vsel %vm427, %v80, 0.0
    %v472 = vsel %vm428, %v81, 0.0
    %v473 = vsel %vm429, %v82, 0.0
    %v474 = vsel %vm430, %v83, 0.0
    %v475 = vsel %vm431, %v84, 0.0
    %v476 = vsel %vm432, %v85, 0.0
    %v477 = vsel %vm433, %v86, 0.0
    %v478 = vsel %vm434, %v87, 0.0
    %v479 = vsel %vm435, %v88, 0.0
    %v480 = vadd.f32 %v467, %v468
    %v481 = vadd.f32 %v480, %v469
    %v482 = vadd.f32 %v481, %v470
    %v483 = vadd.f32 %v482, %v471
    %v484 = vadd.f32 %v483, %v472
    %v485 = vadd.f32 %v484, %v473
    %v486 = vadd.f32 %v485, %v474
    %v487 = vadd.f32 %v486, %v475
    %v488 = vadd.f32 %v487, %v476
    %v489 = vadd.f32 %v488, %v477
    %v490 = vadd.f32 %v489, %v478
    %v491 = vadd.f32 %v490, %v479
    %v492 = vrot.slane %v491, 4
    %v493 = vadd.f32 %v491, %v492
    %v494 = vrot.slane %v493, 2
    %v495 = vadd.f32 %v493, %v494
    %v496 = vrot.slane %v495, 1
    %v497 = vadd.f32 %v495, %v496
    %v498 = vlaneseq
    %v499 = vshrl.u32 %v498, 7
    %v500 = vsub.s32 5, %v499
    %v501 = vrot.slane %v62, %v500
    %vm502 = vcmp.eq.s32.totalorder %v90, %v501
    %vm503 = vcmp.eq.s32.totalorder %v91, %v501
    %vm504 = vcmp.eq.s32.totalorder %v92, %v501
    %vm505 = vcmp.eq.s32.totalorder %v93, %v501
    %vm506 = vcmp.eq.s32.totalorder %v94, %v501
    %vm507 = vcmp.eq.s32.totalorder %v95, %v501
    %vm508 = vcmp.eq.s32.totalorder %v96, %v501
    %vm509 = vcmp.eq.s32.totalorder %v97, %v501
    %vm510 = vcmp.eq.s32.totalorder %v98, %v501
    %vm511 = vcmp.eq.s32.totalorder %v99, %v501
    %vm512 = vcmp.eq.s32.totalorder %v100, %v501
    %vm513 = vcmp.eq.s32.totalorder %v101, %v501
    %vm514 = vcmp.eq.s32.totalorder %v102, %v501
    %v515 = vsel %vm502, %v63, 0.0
    %v516 = vsel %vm503, %v64, 0.0
    %v517 = vsel %vm504, %v65, 0.0
    %v518 = vsel %vm505, %v66, 0.0
    %v519 = vsel %vm506, %v67, 0.0
    %v520 = vsel %vm507, %v68, 0.0
    %v521 = vsel %vm508, %v69, 0.0
    %v522 = vsel %vm509, %v70, 0.0
    %v523 = vsel %vm510, %v71, 0.0
    %v524 = vsel %vm511, %v72, 0.0
    %v525 = vsel %vm512, %v73, 0.0
    %v526 = vsel %vm513, %v74, 0.0
    %v527 = vsel %vm514, %v75, 0.0
    %v528 = vadd.f32 %v515, %v516
    %v529 = vadd.f32 %v528, %v517
    %v530 = vadd.f32 %v529, %v518
    %v531 = vadd.f32 %v530, %v519
    %v532 = vadd.f32 %v531, %v520
    %v533 = vadd.f32 %v532, %v521
    %v534 = vadd.f32 %v533, %v522
    %v535 = vadd.f32 %v534, %v523
    %v536 = vadd.f32 %v535, %v524
    %v537 = vadd.f32 %v536, %v525
    %v538 = vadd.f32 %v537, %v526
    %v539 = vadd.f32 %v538, %v527
    %v540 = vrot.slane %v539, 4
    %v541 = vadd.f32 %v539, %v540
    %v542 = vrot.slane %v541, 2
    %v543 = vadd.f32 %v541, %v542
    %v544 = vrot.slane %v543, 1
    %v545 = vadd.f32 %v543, %v544
    %v546 = vsel %vm502, %v76, 0.0
    %v547 = vsel %vm503, %v77, 0.0
    %v548 = vsel %vm504, %v78, 0.0
    %v549 = vsel %vm505, %v79, 0.0
    %v550 = vsel %vm506, %v80, 0.0
    %v551 = vsel %vm507, %v81, 0.0
    %v552 = vsel %vm508, %v82, 0.0
    %v553 = vsel %vm509, %v83, 0.0
    %v554 = vsel %vm510, %v84, 0.0
    %v555 = vsel %vm511, %v85, 0.0
    %v556 = vsel %vm512, %v86, 0.0
    %v557 = vsel %vm513, %v87, 0.0
    %v558 = vsel %vm514, %v88, 0.0
    %v559 = vadd.f32 %v546, %v547
    %v560 = vadd.f32 %v559, %v548
    %v561 = vadd.f32 %v560, %v549
    %v562 = vadd.f32 %v561, %v550
    %v563 = vadd.f32 %v562, %v551
    %v564 = vadd.f32 %v563, %v552
    %v565 = vadd.f32 %v564, %v553
    %v566 = vadd.f32 %v565, %v554
    %v567 = vadd.f32 %v566, %v555
    %v568 = vadd.f32 %v567, %v556
    %v569 = vadd.f32 %v568, %v557
    %v570 = vadd.f32 %v569, %v558
    %v571 = vrot.slane %v570, 4
    %v572 = vadd.f32 %v570, %v571
    %v573 = vrot.slane %v572, 2
    %v574 = vadd.f32 %v572, %v573
    %v575 = vrot.slane %v574, 1
    %v576 = vadd.f32 %v574, %v575
    %v577 = vlaneseq
    %v578 = vshrl.u32 %v577, 7
    %v579 = vsub.s32 6, %v578
    %v580 = vrot.slane %v62, %v579
    %vm581 = vcmp.eq.s32.totalorder %v90, %v580
    %vm582 = vcmp.eq.s32.totalorder %v91, %v580
    %vm583 = vcmp.eq.s32.totalorder %v92, %v580
    %vm584 = vcmp.eq.s32.totalorder %v93, %v580
    %vm585 = vcmp.eq.s32.totalorder %v94, %v580
    %vm586 = vcmp.eq.s32.totalorder %v95, %v580
    %vm587 = vcmp.eq.s32.totalorder %v96, %v580
    %vm588 = vcmp.eq.s32.totalorder %v97, %v580
    %vm589 = vcmp.eq.s32.totalorder %v98, %v580
    %vm590 = vcmp.eq.s32.totalorder %v99, %v580
    %vm591 = vcmp.eq.s32.totalorder %v100, %v580
    %vm592 = vcmp.eq.s32.totalorder %v101, %v580
    %vm593 = vcmp.eq.s32.totalorder %v102, %v580
    %v594 = vsel %vm581, %v63, 0.0
    %v595 = vsel %vm582, %v64, 0.0
    %v596 = vsel %vm583, %v65, 0.0
    %v597 = vsel %vm584, %v66, 0.0
    %v598 = vsel %vm585, %v67, 0.0
    %v599 = vsel %vm586, %v68, 0.0
    %v600 = vsel %vm587, %v69, 0.0
    %v601 = vsel %vm588, %v70, 0.0
    %v602 = vsel %vm589, %v71, 0.0
    %v603 = vsel %vm590, %v72, 0.0
    %v604 = vsel %vm591, %v73, 0.0
    %v605 = vsel %vm592, %v74, 0.0
    %v606 = vsel %vm593, %v75, 0.0
    %v607 = vadd.f32 %v594, %v595
    %v608 = vadd.f32 %v607, %v596
    %v609 = vadd.f32 %v608, %v597
    %v610 = vadd.f32 %v609, %v598
    %v611 = vadd.f32 %v610, %v599
    %v612 = vadd.f32 %v611, %v600
    %v613 = vadd.f32 %v612, %v601
    %v614 = vadd.f32 %v613, %v602
    %v615 = vadd.f32 %v614, %v603
    %v616 = vadd.f32 %v615, %v604
    %v617 = vadd.f32 %v616, %v605
    %v618 = vadd.f32 %v617, %v606
    %v619 = vrot.slane %v618, 4
    %v620 = vadd.f32 %v618, %v619
    %v621 = vrot.slane %v620, 2
    %v622 = vadd.f32 %v620, %v621
    %v623 = vrot.slane %v622, 1
    %v624 = vadd.f32 %v622, %v623
    %v625 = vsel %vm581, %v76, 0.0
    %v626 = vsel %vm582, %v77, 0.0
    %v627 = vsel %vm583, %v78, 0.0
    %v628 = vsel %vm584, %v79, 0.0
    %v629 = vsel %vm585, %v80, 0.0
    %v630 = vsel %vm586, %v81, 0.0
    %v631 = vsel %vm587, %v82, 0.0
    %v632 = vsel %vm588, %v83, 0.0
    %v633 = vsel %vm589, %v84, 0.0
    %v634 = vsel %vm590, %v85, 0.0
    %v635 = vsel %vm591, %v86, 0.0
    %v636 = vsel %vm592, %v87, 0.0
    %v637 = vsel %vm593, %v88, 0.0
    %v638 = vadd.f32 %v625, %v626
    %v639 = vadd.f32 %v638, %v627
    %v640 = vadd.f32 %v639, %v628
    %v641 = vadd.f32 %v640, %v629
    %v642 = vadd.f32 %v641, %v630
    %v643 = vadd.f32 %v642, %v631
    %v644 = vadd.f32 %v643, %v632
    %v645 = vadd.f32 %v644, %v633
    %v646 = vadd.f32 %v645, %v634
    %v647 = vadd.f32 %v646, %v635
    %v648 = vadd.f32 %v647, %v636
    %v649 = vadd.f32 %v648, %v637
    %v650 = vrot.slane %v649, 4
    %v651 = vadd.f32 %v649, %v650
    %v652 = vrot.slane %v651, 2
    %v653 = vadd.f32 %v651, %v652
    %v654 = vrot.slane %v653, 1
    %v655 = vadd.f32 %v653, %v654
    %v656 = vlaneseq
    %v657 = vshrl.u32 %v656, 7
    %v658 = vsub.s32 7, %v657
    %v659 = vrot.slane %v62, %v658
    %vm660 = vcmp.eq.s32.totalorder %v90, %v659
    %vm661 = vcmp.eq.s32.totalorder %v91, %v659
    %vm662 = vcmp.eq.s32.totalorder %v92, %v659
    %vm663 = vcmp.eq.s32.totalorder %v93, %v659
    %vm664 = vcmp.eq.s32.totalorder %v94, %v659
    %vm665 = vcmp.eq.s32.totalorder %v95, %v659
    %vm666 = vcmp.eq.s32.totalorder %v96, %v659
    %vm667 = vcmp.eq.s32.totalorder %v97, %v659
    %vm668 = vcmp.eq.s32.totalorder %v98, %v659
    %vm669 = vcmp.eq.s32.totalorder %v99, %v659
    %vm670 = vcmp.eq.s32.totalorder %v100, %v659
    %vm671 = vcmp.eq.s32.totalorder %v101, %v659
    %vm672 = vcmp.eq.s32.totalorder %v102, %v659
    %v673 = vsel %vm660, %v63, 0.0
    %v674 = vsel %vm661, %v64, 0.0
    %v675 = vsel %vm662, %v65, 0.0
    %v676 = vsel %vm663, %v66, 0.0
    %v677 = vsel %vm664, %v67, 0.0
    %v678 = vsel %vm665, %v68, 0.0
    %v679 = vsel %vm666, %v69, 0.0
    %v680 = vsel %vm667, %v70, 0.0
    %v681 = vsel %vm668, %v71, 0.0
    %v682 = vsel %vm669, %v72, 0.0
    %v683 = vsel %vm670, %v73, 0.0
    %v684 = vsel %vm671, %v74, 0.0
    %v685 = vsel %vm672, %v75, 0.0
    %v686 = vadd.f32 %v673, %v674
    %v687 = vadd.f32 %v686, %v675
    %v688 = vadd.f32 %v687, %v676
    %v689 = vadd.f32 %v688, %v677
    %v690 = vadd.f32 %v689, %v678
    %v691 = vadd.f32 %v690, %v679
    %v692 = vadd.f32 %v691, %v680
    %v693 = vadd.f32 %v692, %v681
    %v694 = vadd.f32 %v693, %v682
    %v695 = vadd.f32 %v694, %v683
    %v696 = vadd.f32 %v695, %v684
    %v697 = vadd.f32 %v696, %v685
    %v698 = vrot.slane %v697, 4
    %v699 = vadd.f32 %v697, %v698
    %v700 = vrot.slane %v699, 2
    %v701 = vadd.f32 %v699, %v700
    %v702 = vrot.slane %v701, 1
    %v703 = vadd.f32 %v701, %v702
    %v704 = vsel %vm660, %v76, 0.0
    %v705 = vsel %vm661, %v77, 0.0
    %v706 = vsel %vm662, %v78, 0.0
    %v707 = vsel %vm663, %v79, 0.0
    %v708 = vsel %vm664, %v80, 0.0
    %v709 = vsel %vm665, %v81, 0.0
    %v710 = vsel %vm666, %v82, 0.0
    %v711 = vsel %vm667, %v83, 0.0
    %v712 = vsel %vm668, %v84, 0.0
    %v713 = vsel %vm669, %v85, 0.0
    %v714 = vsel %vm670, %v86, 0.0
    %v715 = vsel %vm671, %v87, 0.0
    %v716 = vsel %vm672, %v88, 0.0
    %v717 = vadd.f32 %v704, %v705
    %v718 = vadd.f32 %v717, %v706
    %v719 = vadd.f32 %v718, %v707
    %v720 = vadd.f32 %v719, %v708
    %v721 = vadd.f32 %v720, %v709
    %v722 = vadd.f32 %v721, %v710
    %v723 = vadd.f32 %v722, %v711
    %v724 = vadd.f32 %v723, %v712
    %v725 = vadd.f32 %v724, %v713
    %v726 = vadd.f32 %v725, %v714
    %v727 = vadd.f32 %v726, %v715
    %v728 = vadd.f32 %v727, %v716
    %v729 = vrot.slane %v728, 4
    %v730 = vadd.f32 %v728, %v729
    %v731 = vrot.slane %v730, 2
    %v732 = vadd.f32 %v730, %v731
    %v733 = vrot.slane %v732, 1
    %v734 = vadd.f32 %v732, %v733
    %vm735 = vcmask 1040384
    %v736 = vsel %vm735, %v150, %v229
    %vm737 = vcmask 1041408
    %v738 = vsel %vm737, %v736, %v308
    %vm739 = vcmask 1042432
    %v740 = vsel %vm739, %v738, %v387
    %vm741 = vcmask 1043456
    %v742 = vsel %vm741, %v740, %v466
    %vm743 = vcmask 1044480
    %v744 = vsel %vm743, %v742, %v545
    %vm745 = vcmask 1045504
    %v746 = vsel %vm745, %v744, %v624
    %vm747 = vcmask 1046528
    %v748 = vsel %vm747, %v746, %v703
    %749 = vst [vmem:[%s4] sm:$0xff] %v748
    %v750 = vsel %vm735, %v181, %v260
    %v751 = vsel %vm737, %v750, %v339
    %v752 = vsel %vm739, %v751, %v418
    %v753 = vsel %vm741, %v752, %v497
    %v754 = vsel %vm743, %v753, %v576
    %v755 = vsel %vm745, %v754, %v655
    %v756 = vsel %vm747, %v755, %v734
    %757 = vst [vmem:[%s5] sm:$0xff] %v756
    // Predicated region
    $region22: #{_fused_table_lookup.1} parent=1 // pred_check
      _
    $region23: #{_fused_table_lookup.1} parent=1 // pred_check_branch
      %759 = sbr.rel (0) target = $region25
    $region24: #{_fused_table_lookup.1} parent=1 // pred_region
      _
    $region25: #{_fused_table_lookup.1} parent=1 // pred_fallthru
      _
    // Predicated region
    $region26: #{_fused_table_lookup.1} parent=1 // pred_check
      _
    $region27: #{_fused_table_lookup.1} parent=1 // pred_check_branch
      %761 = sbr.rel (0) target = $region29
    $region28: #{_fused_table_lookup.1} parent=1 // pred_region
      _
    $region29: #{_fused_table_lookup.1} parent=1 // pred_fallthru
      _
    // Predicated region
    $region30: #{_fused_table_lookup.1} parent=1 // pred_check
      _
    $region31: #{_fused_table_lookup.1} parent=1 // pred_check_branch
      %763 = sbr.rel (0) target = $region33
    $region32: #{_fused_table_lookup.1} parent=1 // pred_region
      _
    $region33: #{_fused_table_lookup.1} parent=1 // pred_fallthru
      _
    // Predicated region
    $region34: #{_fused_table_lookup.1} parent=1 // pred_check
      _
    $region35: #{_fused_table_lookup.1} parent=1 // pred_check_branch
      %765 = sbr.rel (0) target = $region37
    $region36: #{_fused_table_lookup.1} parent=1 // pred_region
      _
    $region37: #{_fused_table_lookup.1} parent=1 // pred_fallthru
      _
    %766 = vsyncpa [#allocation5], 1
    %767 = vsyncpa [#allocation7], 1

</llo_original>
